<compile_context>
chip_gen: v5e
topology: v5e:2x2
jax: 0.10.0
libtpu: 0.0.40
codegen_flags: <defaults>
</compile_context>

<pallas_src>
import jax
import jax.numpy as jnp
from jax.experimental import pallas as pl
from jax.experimental.pallas import tpu as pltpu


HIDDEN_DIM = 128     # model spec: nn.Linear(input_dim, 128)
SUBLANE = 16         # bf16 sublane packing -> round batch tiles to multiples of 16
MAX_TILE_B = 2048    # batch tile for large (replay-buffer sized) batches


def _round_up(x, m):
    return (x + m - 1) // m * m


def dqn_kernel(x_ref, w1_ref, b1_ref, w2_ref, b2_ref, o_ref):
    # Cast x to the weight dtype (bf16 or f32) inside the kernel — VPU cast, free
    # under the MXU.  Layer 1: (TB, D_in) @ (D_in, H) -> f32 accumulate.
    x = x_ref[...].astype(w1_ref.dtype)
    h = jnp.dot(x, w1_ref[...], preferred_element_type=jnp.float32)
    # Bias + ReLU in f32 on the VPU (v5e has no bf16 VPU path).
    h = jnp.maximum(h + b1_ref[...], 0.0)
    # Layer 2: cast activation to the weight dtype for the MXU, f32 accumulate.
    out = jnp.dot(h.astype(w2_ref.dtype), w2_ref[...],
                  preferred_element_type=jnp.float32)
    o_ref[...] = (out + b2_ref[...]).astype(o_ref.dtype)


def prep_dqn_params(w1, b1, w2, b2, dtype=jnp.bfloat16):
    """Prepare parameters ONCE (at init / target-network sync), not per call.

    Weights are stored as (in, out) — i.e. the PyTorch Linear weight transposed.
    Pass dtype=jnp.float32 for exact PyTorch f32 Linear semantics (bit-closer
    target-Q values); bf16 halves weight HBM traffic and is the default.
    """
    w1_p = w1.astype(dtype)
    w2_p = w2.astype(dtype)
    b1_2d = b1.reshape(1, -1).astype(jnp.float32)
    b2_2d = b2.reshape(1, -1).astype(jnp.float32)
    return w1_p, b1_2d, w2_p, b2_2d


def dqn_forward(x, w1_p, b1_2d, w2_p, b2_2d):
    """x: (B, D_in) f32.  Prepped params from prep_dqn_params().
    Returns (B, D_out) f32, matching PyTorch y = relu(x @ W1.T + b1) @ W2.T + b2."""
    B, D_in = x.shape
    H = w1_p.shape[1]
    D_out = w2_p.shape[1]

    # Batch tile: big enough to amortize per-step grid overhead, but capped at
    # ~ceil(B/2) (sublane-rounded) so the parallel batch axis produces >=2 grid
    # steps whenever B is large enough — keeps v7x's second TensorCore busy.
    tile_b = min(MAX_TILE_B, _round_up(pl.cdiv(B, 2), SUBLANE))
    grid_b = pl.cdiv(B, tile_b)   # ragged trailing block: Pallas masks its stores

    cost = pl.CostEstimate(
        flops=2 * B * (D_in * H + H * D_out),
        transcendentals=0,
        bytes_accessed=(x.size * x.dtype.itemsize
                        + w1_p.size * w1_p.dtype.itemsize
                        + w2_p.size * w2_p.dtype.itemsize
                        + b1_2d.size * 4 + b2_2d.size * 4
                        + B * D_out * 4),
    )

    return pl.pallas_call(
        dqn_kernel,
        out_shape=jax.ShapeDtypeStruct((B, D_out), jnp.float32),
        grid=(grid_b,),
        in_specs=[
            pl.BlockSpec((tile_b, D_in), lambda i: (i, 0)),   # x tiled over batch
            pl.BlockSpec((D_in, H), lambda i: (0, 0)),        # weights stay VMEM-resident
            pl.BlockSpec((1, H), lambda i: (0, 0)),
            pl.BlockSpec((H, D_out), lambda i: (0, 0)),
            pl.BlockSpec((1, D_out), lambda i: (0, 0)),
        ],
        # Output block's last dim == full array extent (D_out), so no lane padding
        # and no inflated HBM writeback at replay-buffer batch sizes.
        out_specs=pl.BlockSpec((tile_b, D_out), lambda i: (i, 0)),
        compiler_params=pltpu.CompilerParams(
            dimension_semantics=("parallel",)),               # v7x: 2 TCs over batch
        cost_estimate=cost,
    )(x, w1_p, b1_2d, w2_p, b2_2d)


def init_dqn_params(key, input_dim, hidden_dim, output_dim):
    """Deterministic init mirroring PyTorch nn.Linear default U(-1/sqrt(fan_in), +).
    Weights stored as (in, out) — i.e. PyTorch weight transposed."""
    k1, k2, k3, k4 = jax.random.split(key, 4)
    bound1 = 1.0 / jnp.sqrt(input_dim)
    bound2 = 1.0 / jnp.sqrt(hidden_dim)
    w1 = jax.random.uniform(k1, (input_dim, hidden_dim), jnp.float32, -bound1, bound1)
    b1 = jax.random.uniform(k2, (hidden_dim,), jnp.float32, -bound1, bound1)
    w2 = jax.random.uniform(k3, (hidden_dim, output_dim), jnp.float32, -bound2, bound2)
    b2 = jax.random.uniform(k4, (output_dim,), jnp.float32, -bound2, bound2)
    return w1, b1, w2, b2


if __name__ == "__main__":
    key = jax.random.PRNGKey(0)
    kx, kp, kx2 = jax.random.split(key, 3)

    batch, input_dim, hidden_dim, output_dim = 2, 16, 128, 4

    x = jax.random.normal(kx, (batch, input_dim), jnp.float32)
    w1, b1, w2, b2 = init_dqn_params(kp, input_dim, hidden_dim, output_dim)

    # Params are prepped once (as at init / target-network sync), not per call.
    params = prep_dqn_params(w1, b1, w2, b2)   # bf16 MXU operands, f32 accumulate

    forward = jax.jit(dqn_forward)
    out = jax.block_until_ready(forward(x, *params))

    # Reference with the same bf16-operand / f32-accumulate policy as the kernel.
    xb, w1b, w2b = (a.astype(jnp.bfloat16) for a in (x, w1, w2))
    h_ref = jnp.maximum(
        jnp.dot(xb, w1b, preferred_element_type=jnp.float32) + b1, 0.0)
    ref_bf16 = jnp.dot(h_ref.astype(jnp.bfloat16), w2b,
                       preferred_element_type=jnp.float32) + b2
    # Exact f32 reference (PyTorch semantics) with a tolerance for bf16 operands.
    ref_f32 = jnp.maximum(x @ w1 + b1, 0.0) @ w2 + b2

    assert out.shape == (batch, output_dim)
    assert jnp.allclose(out, ref_bf16, atol=1e-2, rtol=1e-2)
    assert jnp.allclose(out, ref_f32, atol=5e-2, rtol=5e-2)

    # Ragged-batch check (B not a multiple of tile_b): exercises Pallas' masked
    # stores on the trailing block with no wrapper-side padding.
    x2 = jax.random.normal(kx2, (33, input_dim), jnp.float32)
    out2 = jax.block_until_ready(forward(x2, *params))
    ref2_f32 = jnp.maximum(x2 @ w1 + b1, 0.0) @ w2 + b2
    assert out2.shape == (33, output_dim)
    assert jnp.allclose(out2, ref2_f32, atol=5e-2, rtol=5e-2)

    print("KERNEL_OK")
</pallas_src>

<mosaic_0001>
module attributes {stable_mosaic.version = 11 : i64} {
  func.func @dqn_kernel(%arg0: i32, %arg1: memref<16x16xf32, #tpu.memory_space<vmem>>, %arg2: memref<16x128xbf16, #tpu.memory_space<vmem>>, %arg3: memref<1x128xf32, #tpu.memory_space<vmem>>, %arg4: memref<128x4xbf16, #tpu.memory_space<vmem>>, %arg5: memref<1x4xf32, #tpu.memory_space<vmem>>, %arg6: memref<16x4xf32, #tpu.memory_space<vmem>>) attributes {dimension_semantics = [#tpu.dimension_semantics<parallel>], iteration_bounds = array<i64: 1>, scalar_prefetch = 0 : i64, scratch_operands = 0 : i64, tpu.core_type = #tpu.core_type<tc>, window_params = [{transform_indices = @transform_0, window_bounds = array<i64: 16, 16>}, {pipeline_mode = #tpu.pipeline_mode<synchronous>, transform_indices = @transform_1, window_bounds = array<i64: 16, 128>}, {pipeline_mode = #tpu.pipeline_mode<synchronous>, transform_indices = @transform_2, window_bounds = array<i64: 1, 128>}, {pipeline_mode = #tpu.pipeline_mode<synchronous>, transform_indices = @transform_3, window_bounds = array<i64: 128, 4>}, {pipeline_mode = #tpu.pipeline_mode<synchronous>, transform_indices = @transform_4, window_bounds = array<i64: 1, 4>}, {transform_indices = @transform_5, window_bounds = array<i64: 16, 4>}]} {
    %c0 = arith.constant 0 : index
    %c0_0 = arith.constant 0 : index
    %0 = vector.load %arg1[%c0, %c0_0] : memref<16x16xf32, #tpu.memory_space<vmem>>, vector<16x16xf32>
    %1 = arith.truncf %0 : vector<16x16xf32> to vector<16x16xbf16>
    %c0_1 = arith.constant 0 : index
    %c0_2 = arith.constant 0 : index
    %2 = vector.load %arg2[%c0_1, %c0_2] : memref<16x128xbf16, #tpu.memory_space<vmem>>, vector<16x128xbf16>
    %cst = arith.constant dense<0.000000e+00> : vector<16x128xf32>
    %3 = tpu.matmul %1, %2, %cst {dimension_numbers = #tpu.dot_dimension_numbers<[1], [0], [0], [1], [0, 0, 1, 1], [], []>} : vector<16x16xbf16>, vector<16x128xbf16>, vector<16x128xf32> -> vector<16x128xf32>
    %c0_3 = arith.constant 0 : index
    %c0_4 = arith.constant 0 : index
    %4 = vector.load %arg3[%c0_3, %c0_4] : memref<1x128xf32, #tpu.memory_space<vmem>>, vector<1x128xf32>
    %5 = vector.broadcast %4 : vector<1x128xf32> to vector<16x128xf32>
    %6 = arith.addf %3, %5 : vector<16x128xf32>
    %cst_5 = arith.constant 0.000000e+00 : f32
    %7 = vector.broadcast %cst_5 : f32 to vector<16x128xf32>
    %8 = arith.maximumf %6, %7 : vector<16x128xf32>
    %9 = arith.truncf %8 : vector<16x128xf32> to vector<16x128xbf16>
    %c0_6 = arith.constant 0 : index
    %c0_7 = arith.constant 0 : index
    %10 = vector.load %arg4[%c0_6, %c0_7] : memref<128x4xbf16, #tpu.memory_space<vmem>>, vector<128x4xbf16>
    %cst_8 = arith.constant dense<0.000000e+00> : vector<16x4xf32>
    %11 = tpu.matmul %9, %10, %cst_8 {dimension_numbers = #tpu.dot_dimension_numbers<[1], [0], [0], [1], [0, 0, 1, 1], [], []>} : vector<16x128xbf16>, vector<128x4xbf16>, vector<16x4xf32> -> vector<16x4xf32>
    %c0_9 = arith.constant 0 : index
    %c0_10 = arith.constant 0 : index
    %12 = vector.load %arg5[%c0_9, %c0_10] : memref<1x4xf32, #tpu.memory_space<vmem>>, vector<1x4xf32>
    %13 = vector.broadcast %12 : vector<1x4xf32> to vector<16x4xf32>
    %14 = arith.addf %11, %13 : vector<16x4xf32>
    %c0_11 = arith.constant 0 : index
    %c0_12 = arith.constant 0 : index
    %15 = vector.load %arg6[%c0_11, %c0_12] : memref<16x4xf32, #tpu.memory_space<vmem>>, vector<16x4xf32>
    tpu.vector_store %arg6[%c0_11, %c0_12], %14 {strides = array<i32>} : memref<16x4xf32, #tpu.memory_space<vmem>>, vector<16x4xf32>,
    return
  }
  func.func @transform_0(%arg0: i32) -> (i32, i32) {
    %c0_i32 = arith.constant 0 : i32
    %c0_i32_0 = arith.constant 0 : i32
    return %arg0, %c0_i32 : i32, i32
  }
  func.func @transform_1(%arg0: i32) -> (i32, i32) {
    %c0_i32 = arith.constant 0 : i32
    %c0_i32_0 = arith.constant 0 : i32
    %c0_i32_1 = arith.constant 0 : i32
    return %c0_i32, %c0_i32_0 : i32, i32
  }
  func.func @transform_2(%arg0: i32) -> (i32, i32) {
    %c0_i32 = arith.constant 0 : i32
    %c0_i32_0 = arith.constant 0 : i32
    %c0_i32_1 = arith.constant 0 : i32
    return %c0_i32, %c0_i32_0 : i32, i32
  }
  func.func @transform_3(%arg0: i32) -> (i32, i32) {
    %c0_i32 = arith.constant 0 : i32
    %c0_i32_0 = arith.constant 0 : i32
    %c0_i32_1 = arith.constant 0 : i32
    return %c0_i32, %c0_i32_0 : i32, i32
  }
  func.func @transform_4(%arg0: i32) -> (i32, i32) {
    %c0_i32 = arith.constant 0 : i32
    %c0_i32_0 = arith.constant 0 : i32
    %c0_i32_1 = arith.constant 0 : i32
    return %c0_i32, %c0_i32_0 : i32, i32
  }
  func.func @transform_5(%arg0: i32) -> (i32, i32) {
    %c0_i32 = arith.constant 0 : i32
    %c0_i32_0 = arith.constant 0 : i32
    return %arg0, %c0_i32 : i32, i32
  }
}

</mosaic_0001>

<llo_original>
// kernel: dqn_forward.1
$region0: #{dqn_forward.1}
  #allocation0 [shape = 'u32[]', space=smem, size = 0x4, offset = 0x4, fixed_abs, tag = 'smem constant byte address 0x4 - core index']
  #allocation1 [shape = 'u32[72,128]{1,0:T(1,128)}', space=vmem, size = 0x9000, scoped, tag = 'internal scratch']
  %s0 = inlined_call_operand.vmem [shape: f32[2,16], index: 0, kind: input, shape index: {}]
  %s1 = inlined_call_operand.vmem [shape: bf16[16,128], index: 1, kind: input, shape index: {}]
  %s2 = inlined_call_operand.vmem [shape: f32[1,128], index: 2, kind: input, shape index: {}]
  %s3 = inlined_call_operand.vmem [shape: bf16[128,4], index: 3, kind: input, shape index: {}]
  %s4 = inlined_call_operand.vmem [shape: f32[1,4], index: 4, kind: input, shape index: {}]
  %s5 = inlined_call_operand.hbm [shape: f32[2,4], index: 5, kind: output, shape index: {}]
  %s6 = sld [smem:[#allocation0]]
  $region30: #{dqn_forward.1} parent=0
    _
  %s8 = ssub.s32 1, %s6
  %s9 = scalar_select 0, %s8, %s6
  $region1: #{dqn_forward.1} parent=0
    #allocation2 [shape = 'u8[8192]{0}', space=vmem, size = 0x2000, scoped, tag = 'output window, operand 0, single buffered']
    #allocation3 [shape = 's32[1]{0}', space=sflag, size = 0x4, scoped, tag = 'scoped memory for dqn_forward.1']
    %10 = vsyncpa [#allocation3], 0
    // Predicated region
    $region2: #{dqn_forward.1} parent=1 // pred_check
      _
    $region3: #{dqn_forward.1} parent=1 // pred_check_branch
      %12 = sbr.rel (0) target = $region5
    $region4: #{dqn_forward.1} parent=1 // pred_region
      _
    $region5: #{dqn_forward.1} parent=1 // pred_fallthru
      _
    // Predicated region
    $region6: #{dqn_forward.1} parent=1 // pred_check
      _
    $region7: #{dqn_forward.1} parent=1 // pred_check_branch
      %14 = sbr.rel (0) target = $region9
    $region8: #{dqn_forward.1} parent=1 // pred_region
      _
    $region9: #{dqn_forward.1} parent=1 // pred_fallthru
      _
    // Predicated region
    $region10: #{dqn_forward.1} parent=1 // pred_check
      _
    $region11: #{dqn_forward.1} parent=1 // pred_check_branch
      %16 = sbr.rel (0) target = $region13
    $region12: #{dqn_forward.1} parent=1 // pred_region
      _
    $region13: #{dqn_forward.1} parent=1 // pred_fallthru
      _
    // Predicated region
    $region14: #{dqn_forward.1} parent=1 // pred_check
      _
    $region15: #{dqn_forward.1} parent=1 // pred_check_branch
      %18 = sbr.rel (0) target = $region17
    $region16: #{dqn_forward.1} parent=1 // pred_region
      _
    $region17: #{dqn_forward.1} parent=1 // pred_fallthru
      _
    // Predicated region
    $region18: #{dqn_forward.1} parent=1 // pred_check
      _
    $region19: #{dqn_forward.1} parent=1 // pred_check_branch
      %20 = sbr.rel (0) target = $region21
    $region20: #{dqn_forward.1} parent=1 // pred_region
      _
    $region21: #{dqn_forward.1} parent=1 // pred_fallthru
      _
    %v22 = vld [vmem:[%s0] sm:$0xff]
    %v23 = vld [vmem:[%s0 + $0x8] sm:$0xff]
    %v24 = vpack.c.bf16 %v23, %v22
    %v25 = vld [vmem:[%s1] sm:$0xf]
    %v26 = vld [vmem:[%s1 + $0x4] sm:$0xf]
    %v27 = vld [vmem:[%s2] sm:$0x1]
    %v29 = vperm.slane %v27, 0
    %v33 = vunpack.c.l.b16 %v25
    %v34 = vunpack.c.l.b16 %v26
    %v35 = vpack.c.b16 %v34, %v33
    %vm37 = vcmask 130048
    %v39 = vsel %vm37, %v24, 0
    %41 = vmatpush.bf16.msra.mxu0 0
    %42 = vmatpush.bf16.msra.mxu0 0
    %43 = vmatpush.bf16.msra.mxu0 0
    %44 = vmatpush.bf16.msra.mxu0 0
    %45 = vmatpush.bf16.msra.mxu0 0
    %46 = vmatpush.bf16.msra.mxu0 0
    %47 = vmatpush.bf16.msra.mxu0 0
    %48 = vmatpush.bf16.msra.mxu0 %v35
    %49 = vmatmul.bf16.gmra.mxu0 %v39
    %v50 = vpop.f32.mrf.mxu0
    %v51 = vadd.f32 %v29, %v50
    %v52 = vpop.f32.mrf.mxu0
    %v53 = vadd.f32 %v29, %v52
    %54 = vdwg.mxu0
    %v55 = vmax.f32 %v51, 0.0
    %v56 = vmax.f32 %v53, 0.0
    %v57 = vpack.c.bf16 %v56, %v55
    %v58 = vld [vmem:[%s3] sm:$0xf]
    %v59 = vld [vmem:[%s3 + $0x4] sm:$0xf]
    %v60 = vld [vmem:[%s3 + $0x8] sm:$0xf]
    %v61 = vld [vmem:[%s3 + $0xc] sm:$0xf]
    %v62 = vld [vmem:[%s3 + $0x10] sm:$0xf]
    %v63 = vld [vmem:[%s3 + $0x14] sm:$0xf]
    %v64 = vld [vmem:[%s3 + $0x18] sm:$0xf]
    %v65 = vld [vmem:[%s3 + $0x1c] sm:$0xf]
    %v66 = vld [vmem:[%s3 + $0x20] sm:$0xf]
    %v67 = vld [vmem:[%s3 + $0x24] sm:$0xf]
    %v68 = vld [vmem:[%s3 + $0x28] sm:$0xf]
    %v69 = vld [vmem:[%s3 + $0x2c] sm:$0xf]
    %v70 = vld [vmem:[%s3 + $0x30] sm:$0xf]
    %v71 = vld [vmem:[%s3 + $0x34] sm:$0xf]
    %v72 = vld [vmem:[%s3 + $0x38] sm:$0xf]
    %v73 = vld [vmem:[%s3 + $0x3c] sm:$0xf]
    %v74 = vld [vmem:[%s4] sm:$0x1]
    %v76 = vperm.slane %v74, 0
    %v94 = vunpack.c.l.b16 %v58
    %v95 = vunpack.c.l.b16 %v59
    %v96 = vunpack.c.l.b16 %v60
    %v97 = vunpack.c.l.b16 %v61
    %v98 = vunpack.c.l.b16 %v62
    %v99 = vunpack.c.l.b16 %v63
    %v100 = vunpack.c.l.b16 %v64
    %v101 = vunpack.c.l.b16 %v65
    %v102 = vunpack.c.l.b16 %v66
    %v103 = vunpack.c.l.b16 %v67
    %v104 = vunpack.c.l.b16 %v68
    %v105 = vunpack.c.l.b16 %v69
    %v106 = vunpack.c.l.b16 %v70
    %v107 = vunpack.c.l.b16 %v71
    %v108 = vunpack.c.l.b16 %v72
    %v109 = vunpack.c.l.b16 %v73
    %v110 = vpack.c.b16 %v95, %v94
    %v111 = vpack.c.b16 %v97, %v96
    %v112 = vpack.c.b16 %v99, %v98
    %v113 = vpack.c.b16 %v101, %v100
    %v114 = vpack.c.b16 %v103, %v102
    %v115 = vpack.c.b16 %v105, %v104
    %v116 = vpack.c.b16 %v107, %v106
    %v117 = vpack.c.b16 %v109, %v108
    %126 = vmatpush.bf16.msra.mxu0 %v117
    %127 = vmatpush.bf16.msra.mxu0 %v116
    %128 = vmatpush.bf16.msra.mxu0 %v115
    %129 = vmatpush.bf16.msra.mxu0 %v114
    %130 = vmatpush.bf16.msra.mxu0 %v113
    %131 = vmatpush.bf16.msra.mxu0 %v112
    %132 = vmatpush.bf16.msra.mxu0 %v111
    %133 = vmatpush.bf16.msra.mxu0 %v110
    %134 = vmatmul.bf16.gmra.mxu0 %v57
    %v135 = vpop.f32.mrf.mxu0
    %v136 = vadd.f32 %v76, %v135
    %v137 = vpop.f32.mrf.mxu0
    %v138 = vadd.f32 %v76, %v137
    %139 = vdwg.mxu0
    %vm140 = vcmask 31744
    %141 = vst.msk [vmem:[#allocation2] sm:$0xff] %vm140, %v136
    %142 = vst.msk [vmem:[#allocation2 + $0x8] sm:$0xff] %vm140, %v138
    // Predicated region
    $region22: #{dqn_forward.1} parent=1 // pred_check
      _
    $region23: #{dqn_forward.1} parent=1 // pred_check_branch
      %144 = sbr.rel (0) target = $region25
    $region24: #{dqn_forward.1} parent=1 // pred_region
      %146 = vsyncadd [#allocation3], 224
      %s147 = sshll.u32 [#allocation2], 4
      %s148 = int_to_ptr.vmem [resolvable:$true] %s147
      %s149 = sshll.u32 %s5, 4
      %s150 = int_to_ptr.hbm [resolvable:$true] %s149
      %155 = dma.vmem_to_hbm [thread:$0]  %s148, 32, %s150, [#allocation3], 32, 32, 2
    $region25: #{dqn_forward.1} parent=1 // pred_fallthru
      _
    // Predicated region
    $region26: #{dqn_forward.1} parent=1 // pred_check
      _
    $region27: #{dqn_forward.1} parent=1 // pred_check_branch
      %157 = sbr.rel (0) target = $region29
    $region28: #{dqn_forward.1} parent=1 // pred_region
      %159 = dma.done [#allocation3], 256
    $region29: #{dqn_forward.1} parent=1 // pred_fallthru
      _
    %160 = vsyncpa [#allocation3], 1

</llo_original>
